<compile_context>
chip_gen: v7x
topology: tpu7x:2x2x1
jax: 0.10.0
libtpu: 0.0.40
codegen_flags: <defaults>
</compile_context>

<pallas_src>
import jax
import jax.numpy as jnp
from jax.experimental import pallas as pl
from jax.experimental.pallas import tpu as pltpu


def _output_sp_kernel(h_ref, s_ref, c_ref, f_ref,
                      wv_w_ref, wh_w_ref, bias_ref, wa_w_ref,
                      out_ref):
    h = h_ref[...]                     # (TB, R)  input dtype
    s = s_ref[...]
    c = c_ref[...]
    f = f_ref[...]

    wv_w = wv_w_ref[...]               # (R, A)
    wh_w = wh_w_ref[...]               # (R, A)
    bias = bias_ref[...]               # (1, A)  = wv_b + wh_b, f32
    wa_w = wa_w_ref[...]               # (1, A)  f32

    tb = h.shape[0]

    # wh(h) + (wv_b + wh_b): a single bias add covers both Linear biases.
    hh = jnp.dot(h, wh_w, preferred_element_type=jnp.float32) + bias  # (TB, A)

    # Fused wv matmul: one (3*TB, R) @ (R, A) MXU pass instead of three.
    x3 = jnp.concatenate([s, c, f], axis=0)                            # (3TB, R)
    v3 = jnp.dot(x3, wv_w, preferred_element_type=jnp.float32)         # (3TB, A)

    def logit(v):
        # tanh -> EUP; wa projection as VPU mul + lane reduce (XLU).
        # wa bias omitted: constant shift before softmax, cancels exactly.
        t = jnp.tanh(hh + v)
        return jnp.sum(t * wa_w, axis=-1, keepdims=True)               # (TB, 1)

    e0 = logit(v3[0 * tb:1 * tb, :])
    e1 = logit(v3[1 * tb:2 * tb, :])
    e2 = logit(v3[2 * tb:3 * tb, :])

    # Softmax over the 3 logits (dim=1 in the PyTorch code).
    m = jnp.maximum(jnp.maximum(e0, e1), e2)
    x0 = jnp.exp(e0 - m)
    x1 = jnp.exp(e1 - m)
    x2 = jnp.exp(e2 - m)
    inv = pl.reciprocal(x0 + x1 + x2, approx=False)
    w0 = x0 * inv
    w1 = x1 * inv
    w2 = x2 * inv

    # bmm(weight[:,None,:], feats).squeeze(1) == weighted sum of the 3 feats.
    out = (w0 * s.astype(jnp.float32)
           + w1 * c.astype(jnp.float32)
           + w2 * f.astype(jnp.float32))
    out_ref[...] = out.astype(out_ref.dtype)


def _choose_batch_tile(B, R, A, itemsize, vmem_budget_bytes=24 << 20):
    """Pick a batch tile that keeps double-buffered activations + resident
    weights + in-kernel temporaries under the VMEM budget (v7x-safe)."""
    weight_bytes = (2 * R * A + 2 * A) * 4
    # 5 streaming (TB,R) blocks, double-buffered, plus f32 temporaries
    # (concat (3TB,R) + projections (4*TB,A)).
    per_row = 5 * R * itemsize * 2 + (3 * R + 4 * A) * 4
    tb = (vmem_budget_bytes - weight_bytes) // per_row
    tb = max(8, min(int(tb), B, 1024))
    return max(8, (tb // 8) * 8)


def output_sp(h, single_feat, comp_feat, fc_feats, params, *, batch_tile=None):
    """Pallas implementation of OutputSP.forward.

    h, single_feat, comp_feat, fc_feats: (B, rnn_size)
    params: dict with wv_w (R,A), wv_b (A,), wh_w (R,A), wh_b (A,),
            wa_w (A,), wa_b scalar
    returns: (B, rnn_size)
    """
    B, R = h.shape
    A = params["wv_w"].shape[1]
    dtype = h.dtype
    itemsize = jnp.dtype(dtype).itemsize

    TB = batch_tile if batch_tile is not None else _choose_batch_tile(B, R, A, itemsize)

    # Pad batch to a multiple of the tile (padded rows are zeros; harmless).
    Bp = pl.cdiv(B, TB) * TB
    if Bp != B:
        pad = ((0, Bp - B), (0, 0))
        h = jnp.pad(h, pad)
        single_feat = jnp.pad(single_feat, pad)
        comp_feat = jnp.pad(comp_feat, pad)
        fc_feats = jnp.pad(fc_feats, pad)

    wv_w = params["wv_w"]
    wh_w = params["wh_w"]
    # Fold the two (A,) biases into one; drop wa_b (cancels in the softmax).
    bias = (params["wv_b"] + params["wh_b"]).astype(jnp.float32).reshape(1, A)
    wa_w = params["wa_w"].astype(jnp.float32).reshape(1, A)

    act_spec = pl.BlockSpec((TB, R), lambda i: (i, 0))
    w_spec = pl.BlockSpec((R, A), lambda i: (0, 0))      # resident weights
    vec_spec = pl.BlockSpec((1, A), lambda i: (0, 0))

    flops = 2 * Bp * R * A * 4                   # wh + fused 3x wv matmuls
    transcendentals = 3 * Bp * A + 3 * Bp        # tanh + exp
    bytes_accessed = (5 * Bp * R) * itemsize + (2 * R * A + 2 * A) * 4

    out = pl.pallas_call(
        _output_sp_kernel,
        out_shape=jax.ShapeDtypeStruct((Bp, R), dtype),
        grid=(Bp // TB,),
        in_specs=[act_spec, act_spec, act_spec, act_spec,
                  w_spec, w_spec, vec_spec, vec_spec],
        out_specs=act_spec,
        compiler_params=pltpu.CompilerParams(
            dimension_semantics=("parallel",),
            vmem_limit_bytes=48 << 20),
        cost_estimate=pl.CostEstimate(
            flops=flops,
            transcendentals=transcendentals,
            bytes_accessed=bytes_accessed),
    )(h, single_feat, comp_feat, fc_feats, wv_w, wh_w, bias, wa_w)

    return out[:B] if Bp != B else out


def output_sp_ref(h, s, c, f, params):
    """Pure-JAX reference (mirrors the PyTorch forward exactly, incl. wa_b)."""
    feats = jnp.stack([s, c, f], axis=1)                        # (B, 3, R)
    feats_ = feats @ params["wv_w"] + params["wv_b"]            # (B, 3, A)
    dot = (h @ params["wh_w"] + params["wh_b"])[:, None, :] + feats_
    logits = jnp.tanh(dot) @ params["wa_w"] + params["wa_b"]    # (B, 3)
    weight = jax.nn.softmax(logits, axis=1)                     # (B, 3)
    return jnp.einsum("bk,bkr->br", weight, feats)              # (B, R)


if __name__ == "__main__":
    # Small, deterministic setup: batch=8, rnn_size=32, att_hid_size=64.
    B, R, A = 8, 32, 64
    key = jax.random.PRNGKey(0)
    k = jax.random.split(key, 10)

    h = jax.random.normal(k[0], (B, R), dtype=jnp.float32)
    single_feat = jax.random.normal(k[1], (B, R), dtype=jnp.float32)
    comp_feat = jax.random.normal(k[2], (B, R), dtype=jnp.float32)
    fc_feats = jax.random.normal(k[3], (B, R), dtype=jnp.float32)

    params = {
        # Linear weights stored as (in, out); biases as (out,)
        "wv_w": jax.random.normal(k[4], (R, A), dtype=jnp.float32) * 0.1,
        "wv_b": jax.random.normal(k[5], (A,), dtype=jnp.float32) * 0.1,
        "wh_w": jax.random.normal(k[6], (R, A), dtype=jnp.float32) * 0.1,
        "wh_b": jax.random.normal(k[7], (A,), dtype=jnp.float32) * 0.1,
        "wa_w": jax.random.normal(k[8], (A,), dtype=jnp.float32) * 0.1,
        "wa_b": jax.random.normal(k[9], (), dtype=jnp.float32) * 0.1,
    }

    out = output_sp(h, single_feat, comp_feat, fc_feats, params)
    out = jax.block_until_ready(out)
    ref = output_sp_ref(h, single_feat, comp_feat, fc_feats, params)
    assert out.shape == (B, R)
    assert jnp.allclose(out, ref, atol=1e-5, rtol=1e-5), (
        f"max abs err {jnp.max(jnp.abs(out - ref))}")

    # Second check: batch not a multiple of the tile (exercises padding + grid>1).
    B2 = 12
    k2 = jax.random.split(jax.random.PRNGKey(1), 4)
    h2 = jax.random.normal(k2[0], (B2, R), dtype=jnp.float32)
    s2 = jax.random.normal(k2[1], (B2, R), dtype=jnp.float32)
    c2 = jax.random.normal(k2[2], (B2, R), dtype=jnp.float32)
    f2 = jax.random.normal(k2[3], (B2, R), dtype=jnp.float32)
    out2 = jax.block_until_ready(output_sp(h2, s2, c2, f2, params, batch_tile=8))
    ref2 = output_sp_ref(h2, s2, c2, f2, params)
    assert out2.shape == (B2, R)
    assert jnp.allclose(out2, ref2, atol=1e-5, rtol=1e-5), (
        f"max abs err {jnp.max(jnp.abs(out2 - ref2))}")

    print("KERNEL_OK")
</pallas_src>

<mosaic_0001>
module attributes {stable_mosaic.version = 11 : i64} {
  func.func @_output_sp_kernel(%arg0: i32, %arg1: memref<8x32xf32, #tpu.memory_space<vmem>>, %arg2: memref<8x32xf32, #tpu.memory_space<vmem>>, %arg3: memref<8x32xf32, #tpu.memory_space<vmem>>, %arg4: memref<8x32xf32, #tpu.memory_space<vmem>>, %arg5: memref<32x64xf32, #tpu.memory_space<vmem>>, %arg6: memref<32x64xf32, #tpu.memory_space<vmem>>, %arg7: memref<1x64xf32, #tpu.memory_space<vmem>>, %arg8: memref<1x64xf32, #tpu.memory_space<vmem>>, %arg9: memref<8x32xf32, #tpu.memory_space<vmem>>) attributes {dimension_semantics = [#tpu.dimension_semantics<parallel>], iteration_bounds = array<i64: 1>, scalar_prefetch = 0 : i64, scratch_operands = 0 : i64, tpu.core_type = #tpu.core_type<tc>, window_params = [{transform_indices = @transform_0, window_bounds = array<i64: 8, 32>}, {transform_indices = @transform_1, window_bounds = array<i64: 8, 32>}, {transform_indices = @transform_2, window_bounds = array<i64: 8, 32>}, {transform_indices = @transform_3, window_bounds = array<i64: 8, 32>}, {pipeline_mode = #tpu.pipeline_mode<synchronous>, transform_indices = @transform_4, window_bounds = array<i64: 32, 64>}, {pipeline_mode = #tpu.pipeline_mode<synchronous>, transform_indices = @transform_5, window_bounds = array<i64: 32, 64>}, {pipeline_mode = #tpu.pipeline_mode<synchronous>, transform_indices = @transform_6, window_bounds = array<i64: 1, 64>}, {pipeline_mode = #tpu.pipeline_mode<synchronous>, transform_indices = @transform_7, window_bounds = array<i64: 1, 64>}, {transform_indices = @transform_8, window_bounds = array<i64: 8, 32>}]} {
    %c0 = arith.constant 0 : index
    %c0_0 = arith.constant 0 : index
    %0 = vector.load %arg1[%c0, %c0_0] : memref<8x32xf32, #tpu.memory_space<vmem>>, vector<8x32xf32>
    %c0_1 = arith.constant 0 : index
    %c0_2 = arith.constant 0 : index
    %1 = vector.load %arg2[%c0_1, %c0_2] : memref<8x32xf32, #tpu.memory_space<vmem>>, vector<8x32xf32>
    %c0_3 = arith.constant 0 : index
    %c0_4 = arith.constant 0 : index
    %2 = vector.load %arg3[%c0_3, %c0_4] : memref<8x32xf32, #tpu.memory_space<vmem>>, vector<8x32xf32>
    %c0_5 = arith.constant 0 : index
    %c0_6 = arith.constant 0 : index
    %3 = vector.load %arg4[%c0_5, %c0_6] : memref<8x32xf32, #tpu.memory_space<vmem>>, vector<8x32xf32>
    %c0_7 = arith.constant 0 : index
    %c0_8 = arith.constant 0 : index
    %4 = vector.load %arg5[%c0_7, %c0_8] : memref<32x64xf32, #tpu.memory_space<vmem>>, vector<32x64xf32>
    %c0_9 = arith.constant 0 : index
    %c0_10 = arith.constant 0 : index
    %5 = vector.load %arg6[%c0_9, %c0_10] : memref<32x64xf32, #tpu.memory_space<vmem>>, vector<32x64xf32>
    %c0_11 = arith.constant 0 : index
    %c0_12 = arith.constant 0 : index
    %6 = vector.load %arg7[%c0_11, %c0_12] : memref<1x64xf32, #tpu.memory_space<vmem>>, vector<1x64xf32>
    %c0_13 = arith.constant 0 : index
    %c0_14 = arith.constant 0 : index
    %7 = vector.load %arg8[%c0_13, %c0_14] : memref<1x64xf32, #tpu.memory_space<vmem>>, vector<1x64xf32>
    %cst = arith.constant dense<0.000000e+00> : vector<8x64xf32>
    %8 = tpu.matmul %0, %5, %cst {dimension_numbers = #tpu.dot_dimension_numbers<[1], [0], [0], [1], [0, 0, 1, 1], [], []>} : vector<8x32xf32>, vector<32x64xf32>, vector<8x64xf32> -> vector<8x64xf32>
    %9 = vector.broadcast %6 : vector<1x64xf32> to vector<8x64xf32>
    %10 = arith.addf %8, %9 : vector<8x64xf32>
    %11 = tpu.concatenate %1, %2, %3 in 0 : vector<8x32xf32>, vector<8x32xf32>, vector<8x32xf32> -> vector<24x32xf32>
    %cst_15 = arith.constant dense<0.000000e+00> : vector<24x64xf32>
    %12 = tpu.matmul %11, %4, %cst_15 {dimension_numbers = #tpu.dot_dimension_numbers<[1], [0], [0], [1], [0, 0, 1, 1], [], []>} : vector<24x32xf32>, vector<32x64xf32>, vector<24x64xf32> -> vector<24x64xf32>
    %13 = vector.extract_strided_slice %12 {offsets = [0, 0], sizes = [8, 64], strides = [1, 1]} : vector<24x64xf32> to vector<8x64xf32>
    %14 = arith.addf %10, %13 : vector<8x64xf32>
    %15 = math.tanh %14 : vector<8x64xf32>
    %16 = vector.broadcast %7 : vector<1x64xf32> to vector<8x64xf32>
    %17 = arith.mulf %15, %16 : vector<8x64xf32>
    %cst_16 = arith.constant dense<0.000000e+00> : vector<8xf32>
    %18 = vector.multi_reduction <add>, %17, %cst_16 [1] : vector<8x64xf32> to vector<8xf32>
    %19 = vector.shape_cast %18 : vector<8xf32> to vector<8x1xf32>
    %20 = vector.extract_strided_slice %12 {offsets = [8, 0], sizes = [8, 64], strides = [1, 1]} : vector<24x64xf32> to vector<8x64xf32>
    %21 = arith.addf %10, %20 : vector<8x64xf32>
    %22 = math.tanh %21 : vector<8x64xf32>
    %23 = vector.broadcast %7 : vector<1x64xf32> to vector<8x64xf32>
    %24 = arith.mulf %22, %23 : vector<8x64xf32>
    %cst_17 = arith.constant dense<0.000000e+00> : vector<8xf32>
    %25 = vector.multi_reduction <add>, %24, %cst_17 [1] : vector<8x64xf32> to vector<8xf32>
    %26 = vector.shape_cast %25 : vector<8xf32> to vector<8x1xf32>
    %27 = vector.extract_strided_slice %12 {offsets = [16, 0], sizes = [8, 64], strides = [1, 1]} : vector<24x64xf32> to vector<8x64xf32>
    %28 = arith.addf %10, %27 : vector<8x64xf32>
    %29 = math.tanh %28 : vector<8x64xf32>
    %30 = vector.broadcast %7 : vector<1x64xf32> to vector<8x64xf32>
    %31 = arith.mulf %29, %30 : vector<8x64xf32>
    %cst_18 = arith.constant dense<0.000000e+00> : vector<8xf32>
    %32 = vector.multi_reduction <add>, %31, %cst_18 [1] : vector<8x64xf32> to vector<8xf32>
    %33 = vector.shape_cast %32 : vector<8xf32> to vector<8x1xf32>
    %34 = arith.maximumf %19, %26 : vector<8x1xf32>
    %35 = arith.maximumf %34, %33 : vector<8x1xf32>
    %36 = arith.subf %19, %35 : vector<8x1xf32>
    %37 = math.exp %36 : vector<8x1xf32>
    %38 = arith.subf %26, %35 : vector<8x1xf32>
    %39 = math.exp %38 : vector<8x1xf32>
    %40 = arith.subf %33, %35 : vector<8x1xf32>
    %41 = math.exp %40 : vector<8x1xf32>
    %42 = arith.addf %37, %39 : vector<8x1xf32>
    %43 = arith.addf %42, %41 : vector<8x1xf32>
    %44 = tpu.reciprocal %43 : vector<8x1xf32> -> vector<8x1xf32>
    %45 = arith.mulf %37, %44 : vector<8x1xf32>
    %46 = arith.mulf %39, %44 : vector<8x1xf32>
    %47 = arith.mulf %41, %44 : vector<8x1xf32>
    %48 = vector.broadcast %45 : vector<8x1xf32> to vector<8x32xf32>
    %49 = arith.mulf %48, %1 : vector<8x32xf32>
    %50 = vector.broadcast %46 : vector<8x1xf32> to vector<8x32xf32>
    %51 = arith.mulf %50, %2 : vector<8x32xf32>
    %52 = arith.addf %49, %51 : vector<8x32xf32>
    %53 = vector.broadcast %47 : vector<8x1xf32> to vector<8x32xf32>
    %54 = arith.mulf %53, %3 : vector<8x32xf32>
    %55 = arith.addf %52, %54 : vector<8x32xf32>
    %c0_19 = arith.constant 0 : index
    %c0_20 = arith.constant 0 : index
    %56 = vector.load %arg9[%c0_19, %c0_20] : memref<8x32xf32, #tpu.memory_space<vmem>>, vector<8x32xf32>
    tpu.vector_store %arg9[%c0_19, %c0_20], %55 {strides = array<i32>} : memref<8x32xf32, #tpu.memory_space<vmem>>, vector<8x32xf32>,
    return
  }
  func.func @transform_0(%arg0: i32) -> (i32, i32) {
    %c0_i32 = arith.constant 0 : i32
    %c0_i32_0 = arith.constant 0 : i32
    return %arg0, %c0_i32 : i32, i32
  }
  func.func @transform_1(%arg0: i32) -> (i32, i32) {
    %c0_i32 = arith.constant 0 : i32
    %c0_i32_0 = arith.constant 0 : i32
    return %arg0, %c0_i32 : i32, i32
  }
  func.func @transform_2(%arg0: i32) -> (i32, i32) {
    %c0_i32 = arith.constant 0 : i32
    %c0_i32_0 = arith.constant 0 : i32
    return %arg0, %c0_i32 : i32, i32
  }
  func.func @transform_3(%arg0: i32) -> (i32, i32) {
    %c0_i32 = arith.constant 0 : i32
    %c0_i32_0 = arith.constant 0 : i32
    return %arg0, %c0_i32 : i32, i32
  }
  func.func @transform_4(%arg0: i32) -> (i32, i32) {
    %c0_i32 = arith.constant 0 : i32
    %c0_i32_0 = arith.constant 0 : i32
    %c0_i32_1 = arith.constant 0 : i32
    return %c0_i32, %c0_i32_0 : i32, i32
  }
  func.func @transform_5(%arg0: i32) -> (i32, i32) {
    %c0_i32 = arith.constant 0 : i32
    %c0_i32_0 = arith.constant 0 : i32
    %c0_i32_1 = arith.constant 0 : i32
    return %c0_i32, %c0_i32_0 : i32, i32
  }
  func.func @transform_6(%arg0: i32) -> (i32, i32) {
    %c0_i32 = arith.constant 0 : i32
    %c0_i32_0 = arith.constant 0 : i32
    %c0_i32_1 = arith.constant 0 : i32
    return %c0_i32, %c0_i32_0 : i32, i32
  }
  func.func @transform_7(%arg0: i32) -> (i32, i32) {
    %c0_i32 = arith.constant 0 : i32
    %c0_i32_0 = arith.constant 0 : i32
    %c0_i32_1 = arith.constant 0 : i32
    return %c0_i32, %c0_i32_0 : i32, i32
  }
  func.func @transform_8(%arg0: i32) -> (i32, i32) {
    %c0_i32 = arith.constant 0 : i32
    %c0_i32_0 = arith.constant 0 : i32
    return %arg0, %c0_i32 : i32, i32
  }
}

</mosaic_0001>

<llo_original>
// kernel: tpu_custom_call.1
$region0: #{tpu_custom_call.1}
  #allocation0 [shape = 'u32[]', space=smem, size = 0x4, offset = 0x4, fixed_abs, tag = 'smem constant byte address 0x4 - core index']
  #allocation1 [shape = 'u32[144,128]{1,0:T(1,128)}', space=vmem, size = 0x12000, scoped, tag = 'internal scratch']
  %s0 = inlined_call_operand.hbm [shape: f32[8,32], index: 0, kind: input, shape index: {}]
  %s1 = inlined_call_operand.hbm [shape: f32[8,32], index: 1, kind: input, shape index: {}]
  %s2 = inlined_call_operand.hbm [shape: f32[8,32], index: 2, kind: input, shape index: {}]
  %s3 = inlined_call_operand.vmem [shape: f32[8,32], index: 3, kind: input, shape index: {}]
  %s4 = inlined_call_operand.hbm [shape: f32[32,64], index: 4, kind: input, shape index: {}]
  %s5 = inlined_call_operand.hbm [shape: f32[32,64], index: 5, kind: input, shape index: {}]
  %s6 = inlined_call_operand.vmem [shape: f32[1,64], index: 6, kind: input, shape index: {}]
  %s7 = inlined_call_operand.vmem [shape: f32[1,64], index: 7, kind: input, shape index: {}]
  %s8 = inlined_call_operand.hbm [shape: f32[8,32], index: 8, kind: output, shape index: {}]
  %s9 = sld [smem:[#allocation0]]
  $region62: #{tpu_custom_call.1} parent=0
    _
  %s11 = ssub.s32 1, %s9
  %s12 = scalar_select 0, %s11, %s9
  $region1: #{tpu_custom_call.1} parent=0
    #allocation2 [shape = 'u8[4096]{0}', space=vmem, size = 0x1000, scoped, tag = 'input window, operand 0, single buffered']
    #allocation3 [shape = 's32[1]{0}', space=sflag, size = 0x4, scoped, tag = 'scoped memory for tpu_custom_call.1']
    #allocation4 [shape = 's32[1]{0}', space=sflag, size = 0x4, scoped, tag = 'scoped memory for tpu_custom_call.1']
    #allocation5 [shape = 'u8[4096]{0}', space=vmem, size = 0x1000, scoped, tag = 'input window, operand 1, single buffered']
    #allocation6 [shape = 's32[1]{0}', space=sflag, size = 0x4, scoped, tag = 'scoped memory for tpu_custom_call.1']
    #allocation7 [shape = 'u8[4096]{0}', space=vmem, size = 0x1000, scoped, tag = 'input window, operand 2, single buffered']
    #allocation8 [shape = 'u8[16384]{0}', space=vmem, size = 0x4000, scoped, tag = 'input window, operand 4, single buffered']
    #allocation9 [shape = 's32[1]{0}', space=sflag, size = 0x4, scoped, tag = 'scoped memory for tpu_custom_call.1']
    #allocation10 [shape = 'u8[16384]{0}', space=vmem, size = 0x4000, scoped, tag = 'input window, operand 5, single buffered']
    #allocation11 [shape = 'u8[4096]{0}', space=vmem, size = 0x1000, scoped, tag = 'output window, operand 0, single buffered']
    %13 = vsyncpa [#allocation3], 0
    %14 = vsyncpa [#allocation6], 0
    %15 = vsyncpa [#allocation9], 0
    %16 = vsyncpa [#allocation4], 0
    // Predicated region
    $region2: #{tpu_custom_call.1} parent=1 // pred_check
      _
    $region3: #{tpu_custom_call.1} parent=1 // pred_check_branch
      %18 = sbr.rel (0) target = $region5
    $region4: #{tpu_custom_call.1} parent=1 // pred_region
      %s20 = ssub.s32 128, 128
      %21 = vsyncadd [#allocation3], %s20
      %s23 = sshll.u32 [#allocation2], 4
      %s24 = int_to_ptr.vmem [resolvable:$true] %s23
      %26 = dma.hbm_to_vmem [thread:$0]  %s0, 128, %s24, [#allocation3]
    $region5: #{tpu_custom_call.1} parent=1 // pred_fallthru
      _
    // Predicated region
    $region6: #{tpu_custom_call.1} parent=1 // pred_check
      _
    $region7: #{tpu_custom_call.1} parent=1 // pred_check_branch
      %28 = sbr.rel (0) target = $region9
    $region8: #{tpu_custom_call.1} parent=1 // pred_region
      %s30 = ssub.s32 128, 128
      %31 = vsyncadd [#allocation6], %s30
      %s33 = sshll.u32 [#allocation5], 4
      %s34 = int_to_ptr.vmem [resolvable:$true] %s33
      %36 = dma.hbm_to_vmem [thread:$0]  %s1, 128, %s34, [#allocation6]
    $region9: #{tpu_custom_call.1} parent=1 // pred_fallthru
      _
    // Predicated region
    $region10: #{tpu_custom_call.1} parent=1 // pred_check
      _
    $region11: #{tpu_custom_call.1} parent=1 // pred_check_branch
      %38 = sbr.rel (0) target = $region13
    $region12: #{tpu_custom_call.1} parent=1 // pred_region
      %s40 = ssub.s32 128, 128
      %41 = vsyncadd [#allocation6], %s40
      %s43 = sshll.u32 [#allocation7], 4
      %s44 = int_to_ptr.vmem [resolvable:$true] %s43
      %46 = dma.hbm_to_vmem [thread:$0]  %s2, 128, %s44, [#allocation6]
    $region13: #{tpu_custom_call.1} parent=1 // pred_fallthru
      _
    // Predicated region
    $region14: #{tpu_custom_call.1} parent=1 // pred_check
      _
    $region15: #{tpu_custom_call.1} parent=1 // pred_check_branch
      %48 = sbr.rel (0) target = $region17
    $region16: #{tpu_custom_call.1} parent=1 // pred_region
      _
    $region17: #{tpu_custom_call.1} parent=1 // pred_fallthru
      _
    // Predicated region
    $region18: #{tpu_custom_call.1} parent=1 // pred_check
      _
    $region19: #{tpu_custom_call.1} parent=1 // pred_check_branch
      %50 = sbr.rel (0) target = $region21
    $region20: #{tpu_custom_call.1} parent=1 // pred_region
      %s52 = ssub.s32 512, 512
      %53 = vsyncadd [#allocation9], %s52
      %s54 = sshll.u32 [#allocation8], 4
      %s55 = int_to_ptr.vmem [resolvable:$true] %s54
      %60 = dma.hbm_to_vmem [thread:$0]  %s4, 512, %s55, [#allocation9], 128, 128, 8
    $region21: #{tpu_custom_call.1} parent=1 // pred_fallthru
      _
    // Predicated region
    $region22: #{tpu_custom_call.1} parent=1 // pred_check
      _
    $region23: #{tpu_custom_call.1} parent=1 // pred_check_branch
      %62 = sbr.rel (0) target = $region25
    $region24: #{tpu_custom_call.1} parent=1 // pred_region
      %s64 = ssub.s32 512, 512
      %65 = vsyncadd [#allocation9], %s64
      %s66 = sshll.u32 [#allocation10], 4
      %s67 = int_to_ptr.vmem [resolvable:$true] %s66
      %72 = dma.hbm_to_vmem [thread:$0]  %s5, 512, %s67, [#allocation9], 128, 128, 8
    $region25: #{tpu_custom_call.1} parent=1 // pred_fallthru
      _
    // Predicated region
    $region26: #{tpu_custom_call.1} parent=1 // pred_check
      _
    $region27: #{tpu_custom_call.1} parent=1 // pred_check_branch
      %74 = sbr.rel (0) target = $region29
    $region28: #{tpu_custom_call.1} parent=1 // pred_region
      _
    $region29: #{tpu_custom_call.1} parent=1 // pred_fallthru
      _
    // Predicated region
    $region30: #{tpu_custom_call.1} parent=1 // pred_check
      _
    $region31: #{tpu_custom_call.1} parent=1 // pred_check_branch
      %76 = sbr.rel (0) target = $region33
    $region32: #{tpu_custom_call.1} parent=1 // pred_region
      _
    $region33: #{tpu_custom_call.1} parent=1 // pred_fallthru
      _
    // Predicated region
    $region34: #{tpu_custom_call.1} parent=1 // pred_check
      _
    $region35: #{tpu_custom_call.1} parent=1 // pred_check_branch
      %78 = sbr.rel (0) target = $region37
    $region36: #{tpu_custom_call.1} parent=1 // pred_region
      %79 = dma.done [#allocation3], 128
    $region37: #{tpu_custom_call.1} parent=1 // pred_fallthru
      _
    // Predicated region
    $region38: #{tpu_custom_call.1} parent=1 // pred_check
      _
    $region39: #{tpu_custom_call.1} parent=1 // pred_check_branch
      %81 = sbr.rel (0) target = $region41
    $region40: #{tpu_custom_call.1} parent=1 // pred_region
      %82 = dma.done [#allocation6], 128
    $region41: #{tpu_custom_call.1} parent=1 // pred_fallthru
      _
    // Predicated region
    $region42: #{tpu_custom_call.1} parent=1 // pred_check
      _
    $region43: #{tpu_custom_call.1} parent=1 // pred_check_branch
      %84 = sbr.rel (0) target = $region45
    $region44: #{tpu_custom_call.1} parent=1 // pred_region
      %85 = dma.done [#allocation6], 128
    $region45: #{tpu_custom_call.1} parent=1 // pred_fallthru
      _
    // Predicated region
    $region46: #{tpu_custom_call.1} parent=1 // pred_check
      _
    $region47: #{tpu_custom_call.1} parent=1 // pred_check_branch
      %87 = sbr.rel (0) target = $region49
    $region48: #{tpu_custom_call.1} parent=1 // pred_region
      %88 = dma.done [#allocation9], 512
    $region49: #{tpu_custom_call.1} parent=1 // pred_fallthru
      _
    // Predicated region
    $region50: #{tpu_custom_call.1} parent=1 // pred_check
      _
    $region51: #{tpu_custom_call.1} parent=1 // pred_check_branch
      %90 = sbr.rel (0) target = $region53
    $region52: #{tpu_custom_call.1} parent=1 // pred_region
      %91 = dma.done [#allocation9], 512
    $region53: #{tpu_custom_call.1} parent=1 // pred_fallthru
      _
    %v92 = vld [vmem:[#allocation2] sm:$0xff]
    %v93 = vld [vmem:[#allocation5] sm:$0xff]
    %v94 = vld [vmem:[#allocation7] sm:$0xff]
    %v95 = vld [vmem:[%s3] sm:$0xff]
    %v96 = vld [vmem:[#allocation8] sm:$0xff]
    %v97 = vld [vmem:[#allocation8 + $0x8] sm:$0xff]
    %v98 = vld [vmem:[#allocation8 + $0x10] sm:$0xff]
    %v99 = vld [vmem:[#allocation8 + $0x18] sm:$0xff]
    %v100 = vld [vmem:[#allocation10] sm:$0xff]
    %v101 = vld [vmem:[#allocation10 + $0x8] sm:$0xff]
    %v102 = vld [vmem:[#allocation10 + $0x10] sm:$0xff]
    %v103 = vld [vmem:[#allocation10 + $0x18] sm:$0xff]
    %v104 = vld [vmem:[%s6] sm:$0x1]
    %v105 = vld [vmem:[%s7] sm:$0x1]
    %v107 = vlaneseq
    %v108 = vshrl.u32 %v107, 7
    %v109 = vsub.s32 0, %v108
    %v110 = vrot.slane %v104, %v109
    %vm112 = vcmask 261120
    %v114 = vsel %vm112, %v92, 0
    %116 = vmatprep.subr.mxu0 0.0
    %117 = vmatpush1.msra.mxu0 %v100
    %118 = vmatprep.subr.mxu0 0.0
    %119 = vmatpush1.msra.mxu0 %v101
    %120 = vmatprep.subr.mxu0 0.0
    %121 = vmatpush1.msra.mxu0 %v102
    %122 = vmatprep.subr.mxu0 0.0
    %123 = vmatpush1.msra.mxu0 %v103
    %124 = vmatprep.subr.mxu0 0.0
    %125 = vmatpush1.msra.mxu0 0.0
    %126 = vmatprep.subr.mxu0 0.0
    %127 = vmatpush1.msra.mxu0 0.0
    %128 = vmatprep.subr.mxu0 0.0
    %129 = vmatpush1.msra.mxu0 0.0
    %130 = vmatprep.subr.mxu0 0.0
    %131 = vmatpush1.msra.mxu0 0.0
    %132 = vmatprep.subr.mxu0 0.0
    %133 = vmatpush1.msra.mxu0 0.0
    %134 = vmatprep.subr.mxu0 0.0
    %135 = vmatpush1.msra.mxu0 0.0
    %136 = vmatprep.subr.mxu0 0.0
    %137 = vmatpush1.msra.mxu0 0.0
    %138 = vmatprep.subr.mxu0 0.0
    %139 = vmatpush1.msra.mxu0 0.0
    %140 = vmatprep.subr.mxu0 0.0
    %141 = vmatpush1.msra.mxu0 0.0
    %142 = vmatprep.subr.mxu0 0.0
    %143 = vmatpush1.msra.mxu0 0.0
    %144 = vmatprep.subr.mxu0 0.0
    %145 = vmatpush1.msra.mxu0 0.0
    %146 = vmatprep.subr.mxu0 0.0
    %147 = vmatpush1.msra.mxu0 0.0
    %148 = vmatprep.subr.mxu0 0.0
    %149 = vmatpush1.msra.mxu0 0.0
    %150 = vmatprep.subr.mxu0 0.0
    %151 = vmatpush1.msra.mxu0 0.0
    %152 = vmatprep.subr.mxu0 0.0
    %153 = vmatpush1.msra.mxu0 0.0
    %154 = vmatprep.subr.mxu0 0.0
    %155 = vmatpush1.msra.mxu0 0.0
    %156 = vmatprep.subr.mxu0 0.0
    %157 = vmatpush1.msra.mxu0 0.0
    %158 = vmatprep.subr.mxu0 0.0
    %159 = vmatpush1.msra.mxu0 0.0
    %160 = vmatprep.subr.mxu0 0.0
    %161 = vmatpush1.msra.mxu0 0.0
    %162 = vmatprep.subr.mxu0 0.0
    %163 = vmatpush1.msra.mxu0 0.0
    %164 = vmatprep.subr.mxu0 0.0
    %165 = vmatpush1.msra.mxu0 0.0
    %166 = vmatprep.subr.mxu0 0.0
    %167 = vmatpush1.msra.mxu0 0.0
    %168 = vmatprep.subr.mxu0 0.0
    %169 = vmatpush1.msra.mxu0 0.0
    %170 = vmatprep.subr.mxu0 0.0
    %171 = vmatpush1.msra.mxu0 0.0
    %172 = vmatprep.subr.mxu0 0.0
    %173 = vmatpush1.msra.mxu0 0.0
    %174 = vmatprep.subr.mxu0 0.0
    %175 = vmatpush1.msra.mxu0 0.0
    %176 = vmatprep.subr.mxu0 0.0
    %177 = vmatpush1.msra.mxu0 0.0
    %178 = vmatprep.subr.mxu0 0.0
    %179 = vmatpush1.msra.mxu0 0.0
    %180 = vmatprep.mubr.f32.mxu0 0.0
    %181 = vmatmul.mubr.f32.gmra.mrb[0].mxu0 %v114
    %v182 = vpop.f32.mrb[0].mxu0
    %v183 = vadd.f32 %v110, %v182
    %v184 = vpop.f32.mrb[0].mxu0
    %185 = vdwg.mxu0
    %v187 = vsel %vm112, %v93, 0
    %v190 = vsel %vm112, %v94, 0
    %v193 = vsel %vm112, %v95, 0
    %195 = vmatprep.subr.mxu0 0.0
    %196 = vmatpush1.msra.mxu0 %v96
    %197 = vmatprep.subr.mxu0 0.0
    %198 = vmatpush1.msra.mxu0 %v97
    %199 = vmatprep.subr.mxu0 0.0
    %200 = vmatpush1.msra.mxu0 %v98
    %201 = vmatprep.subr.mxu0 0.0
    %202 = vmatpush1.msra.mxu0 %v99
    %203 = vmatprep.subr.mxu0 0.0
    %204 = vmatpush1.msra.mxu0 0.0
    %205 = vmatprep.subr.mxu0 0.0
    %206 = vmatpush1.msra.mxu0 0.0
    %207 = vmatprep.subr.mxu0 0.0
    %208 = vmatpush1.msra.mxu0 0.0
    %209 = vmatprep.subr.mxu0 0.0
    %210 = vmatpush1.msra.mxu0 0.0
    %211 = vmatprep.subr.mxu0 0.0
    %212 = vmatpush1.msra.mxu0 0.0
    %213 = vmatprep.subr.mxu0 0.0
    %214 = vmatpush1.msra.mxu0 0.0
    %215 = vmatprep.subr.mxu0 0.0
    %216 = vmatpush1.msra.mxu0 0.0
    %217 = vmatprep.subr.mxu0 0.0
    %218 = vmatpush1.msra.mxu0 0.0
    %219 = vmatprep.subr.mxu0 0.0
    %220 = vmatpush1.msra.mxu0 0.0
    %221 = vmatprep.subr.mxu0 0.0
    %222 = vmatpush1.msra.mxu0 0.0
    %223 = vmatprep.subr.mxu0 0.0
    %224 = vmatpush1.msra.mxu0 0.0
    %225 = vmatprep.subr.mxu0 0.0
    %226 = vmatpush1.msra.mxu0 0.0
    %227 = vmatprep.subr.mxu0 0.0
    %228 = vmatpush1.msra.mxu0 0.0
    %229 = vmatprep.subr.mxu0 0.0
    %230 = vmatpush1.msra.mxu0 0.0
    %231 = vmatprep.subr.mxu0 0.0
    %232 = vmatpush1.msra.mxu0 0.0
    %233 = vmatprep.subr.mxu0 0.0
    %234 = vmatpush1.msra.mxu0 0.0
    %235 = vmatprep.subr.mxu0 0.0
    %236 = vmatpush1.msra.mxu0 0.0
    %237 = vmatprep.subr.mxu0 0.0
    %238 = vmatpush1.msra.mxu0 0.0
    %239 = vmatprep.subr.mxu0 0.0
    %240 = vmatpush1.msra.mxu0 0.0
    %241 = vmatprep.subr.mxu0 0.0
    %242 = vmatpush1.msra.mxu0 0.0
    %243 = vmatprep.subr.mxu0 0.0
    %244 = vmatpush1.msra.mxu0 0.0
    %245 = vmatprep.subr.mxu0 0.0
    %246 = vmatpush1.msra.mxu0 0.0
    %247 = vmatprep.subr.mxu0 0.0
    %248 = vmatpush1.msra.mxu0 0.0
    %249 = vmatprep.subr.mxu0 0.0
    %250 = vmatpush1.msra.mxu0 0.0
    %251 = vmatprep.subr.mxu0 0.0
    %252 = vmatpush1.msra.mxu0 0.0
    %253 = vmatprep.subr.mxu0 0.0
    %254 = vmatpush1.msra.mxu0 0.0
    %255 = vmatprep.subr.mxu0 0.0
    %256 = vmatpush1.msra.mxu0 0.0
    %257 = vmatprep.subr.mxu0 0.0
    %258 = vmatpush1.msra.mxu0 0.0
    %259 = vmatprep.mubr.f32.mxu0 0.0
    %260 = vmatmul.mubr.f32.gmra.mrb[0].mxu0 %v187
    %v261 = vpop.f32.mrb[0].mxu0
    %v262 = vadd.f32 0.0, %v261
    %v263 = vpop.f32.mrb[0].mxu0
    %264 = vmatprep.mubr.f32.mxu0 0.0
    %265 = vmatmul.mubr.f32.gmra.mrb[0].mxu0 %v190
    %v266 = vpop.f32.mrb[0].mxu0
    %v267 = vadd.f32 0.0, %v266
    %v268 = vpop.f32.mrb[0].mxu0
    %269 = vmatprep.mubr.f32.mxu0 0.0
    %270 = vmatmul.mubr.f32.gmra.mrb[0].mxu0 %v193
    %v271 = vpop.f32.mrb[0].mxu0
    %v272 = vadd.f32 0.0, %v271
    %v273 = vpop.f32.mrb[0].mxu0
    %274 = vdwg.mxu0
    %v275 = vadd.f32 %v183, %v262
    %v276 = vtanh.pop %v275
    %v278 = vlaneseq
    %v279 = vshrl.u32 %v278, 7
    %v280 = vsub.s32 0, %v279
    %v281 = vrot.slane %v105, %v280
    %v283 = vmul.f32 %v276, %v281
    %vm284 = vcmask 523264
    %v285 = vsel %vm284, %v283, 0.0
    %286 = vadd.xlane.f32.xlu0 %v285
    %v287 = vpop.xlane.xlu0 %286
    %v288 = vadd.f32 %v183, %v267
    %v289 = vtanh.pop %v288
    %v290 = vmul.f32 %v289, %v281
    %v291 = vsel %vm284, %v290, 0.0
    %292 = vadd.xlane.f32.xlu0 %v291
    %v293 = vpop.xlane.xlu0 %292
    %v294 = vadd.f32 %v183, %v272
    %v295 = vtanh.pop %v294
    %v296 = vmul.f32 %v295, %v281
    %v297 = vsel %vm284, %v296, 0.0
    %298 = vadd.xlane.f32.xlu0 %v297
    %v299 = vpop.xlane.xlu0 %298
    %v300 = vmax.f32 %v287, %v293
    %v301 = vmax.f32 %v300, %v299
    %v302 = vsub.f32 %v287, %v301
    %v303 = vmul.f32 %v302, 1.442695
    %v304 = vpow.pop %v303
    %v305 = vsub.f32 %v293, %v301
    %v306 = vmul.f32 %v305, 1.442695
    %v307 = vpow.pop %v306
    %v308 = vsub.f32 %v299, %v301
    %v309 = vmul.f32 %v308, 1.442695
    %v310 = vpow.pop %v309
    %v311 = vadd.f32 %v304, %v307
    %v312 = vadd.f32 %v311, %v310
    %v313 = vrcp.pop %v312
    %v314 = vmul.f32 %v304, %v313
    %v315 = vmul.f32 %v307, %v313
    %v316 = vmul.f32 %v310, %v313
    %v317 = vmul.f32 %v314, %v93
    %v318 = vmul.f32 %v315, %v94
    %v319 = vadd.f32 %v317, %v318
    %v320 = vmul.f32 %v316, %v95
    %v321 = vadd.f32 %v319, %v320
    %322 = vst.msk [vmem:[#allocation11] sm:$0xff] %vm112, %v321
    // Predicated region
    $region54: #{tpu_custom_call.1} parent=1 // pred_check
      _
    $region55: #{tpu_custom_call.1} parent=1 // pred_check_branch
      %324 = sbr.rel (0) target = $region57
    $region56: #{tpu_custom_call.1} parent=1 // pred_region
      %s326 = ssub.s32 128, 128
      %327 = vsyncadd [#allocation4], %s326
      %s329 = sshll.u32 [#allocation11], 4
      %s330 = int_to_ptr.vmem [resolvable:$true] %s329
      %332 = dma.vmem_to_hbm [thread:$0]  %s330, 128, %s8, [#allocation4]
    $region57: #{tpu_custom_call.1} parent=1 // pred_fallthru
      _
    // Predicated region
    $region58: #{tpu_custom_call.1} parent=1 // pred_check
      _
    $region59: #{tpu_custom_call.1} parent=1 // pred_check_branch
      %334 = sbr.rel (0) target = $region61
    $region60: #{tpu_custom_call.1} parent=1 // pred_region
      %335 = dma.done [#allocation4], 128
    $region61: #{tpu_custom_call.1} parent=1 // pred_fallthru
      _
    %336 = vsyncpa [#allocation3], 1
    %337 = vsyncpa [#allocation6], 1
    %338 = vsyncpa [#allocation9], 1
    %339 = vsyncpa [#allocation4], 1

</llo_original>
